<compile_context>
chip_gen: v5e
topology: v5e:2x2
jax: 0.10.0
libtpu: 0.0.40
codegen_flags: <defaults>
</compile_context>

<pallas_src>
import functools

import jax
import jax.numpy as jnp
from jax import lax
from jax.experimental import pallas as pl
from jax.experimental.pallas import tpu as pltpu

EPS = 1e-5  # nn.LayerNorm default


# ----------------------------------------------------------------------------
# Kernel
# ----------------------------------------------------------------------------
def _layernorm_kernel(x_ref, wb_ref, o_ref):
    # x_ref: (TR, D) row tile; wb_ref: (2, D) with row 0 = weight, row 1 = bias.
    x = x_ref[...].astype(jnp.float32)
    # Two-pass, centered statistics in f32 (matches nn.LayerNorm numerics; the
    # extra pass is over a VMEM-resident tile -> free for a mem-bound kernel).
    mean = jnp.mean(x, axis=-1, keepdims=True)
    xc = x - mean
    var = jnp.mean(xc * xc, axis=-1, keepdims=True)
    y = xc * lax.rsqrt(var + EPS)
    # Epilogue runs in wb's dtype: f32 everywhere, bf16 on chips with a bf16
    # VALU (chosen by the wrapper) to halve vreg/VMEM footprint on the store
    # path.  Statistics above always stay f32.
    w = wb_ref[0, :]
    b = wb_ref[1, :]
    o_ref[...] = (y.astype(wb_ref.dtype) * w + b).astype(o_ref.dtype)


# ----------------------------------------------------------------------------
# Helpers
# ----------------------------------------------------------------------------
def _sublane_multiple(dtype):
    # Sub-32-bit dtypes pack along sublanes: f32 -> 8, bf16 -> 16, int8 -> 32.
    itemsize = jnp.dtype(dtype).itemsize
    return max(8, 32 // itemsize)


def _round_up(x, m):
    return ((x + m - 1) // m) * m


@functools.lru_cache(maxsize=1)
def _chip_traits():
    """Best-effort, failure-tolerant generation detection."""
    kind = ""
    try:
        kind = jax.devices()[0].device_kind.lower()
    except Exception:
        pass
    vmem_bytes = None
    try:
        vmem_bytes = int(pltpu.get_tpu_info().vmem_capacity_bytes)
    except Exception:
        pass
    two_core = ("v7" in kind) or ("tpu7" in kind) or ("tpu 7" in kind)
    small_vmem = two_core or (vmem_bytes is not None
                              and vmem_bytes <= 64 * 1024 * 1024)
    bf16_valu = two_core or ("v6" in kind)  # v5e has no bf16 VALU
    return {
        "two_core": two_core,
        "small_vmem": small_vmem,
        "bf16_valu": bf16_valu,
        "vmem_bytes": vmem_bytes,
    }


def _layernorm_xla(x2d, wb):
    xf = x2d.astype(jnp.float32)
    w = wb[0].astype(jnp.float32)
    b = wb[1].astype(jnp.float32)
    mean = jnp.mean(xf, axis=-1, keepdims=True)
    var = jnp.mean(jnp.square(xf - mean), axis=-1, keepdims=True)
    y = (xf - mean) * lax.rsqrt(var + EPS) * w + b
    return y.astype(x2d.dtype)


# ----------------------------------------------------------------------------
# Wrapper
# ----------------------------------------------------------------------------
def layernorm_pallas(x2d, wb, *, tile_rows=None):
    """x2d: (N, D) array; wb: (2, D) fused weight/bias (epilogue dtype)."""
    n, d = x2d.shape
    dtype = x2d.dtype
    itemsize = jnp.dtype(dtype).itemsize
    sub = _sublane_multiple(dtype)
    traits = _chip_traits()

    # Lane-sparse output (D < 128): masked vst.msk partial stores + per-step
    # overhead dominate; fused XLA wins there.  Also trivially-empty inputs.
    if d < 128 or n == 0:
        return _layernorm_xla(x2d, wb)

    small_vmem = traits["small_vmem"]

    # VMEM accounting (per grid step):
    #   double-buffered input + output tiles  : 4 * tile_rows * d * itemsize
    #   f32 intermediates (x, xc, y)          : ~3 * tile_rows * d * 4
    per_row_bytes = 4 * d * itemsize + 3 * d * 4
    hard_cap = (48 if small_vmem else 100) * 1024 * 1024
    if traits["vmem_bytes"]:
        hard_cap = min(hard_cap, int(traits["vmem_bytes"]) * 3 // 4)
    tile_budget = hard_cap - 8 * 1024 * 1024  # headroom: wb bufs + scratch

    if per_row_bytes * sub > tile_budget:
        # Pathologically wide rows: a single sublane-group already blows the
        # budget -> let XLA handle it.
        return _layernorm_xla(x2d, wb)

    # Size the INPUT tile by bytes (bandwidth-bound op): multi-MiB tiles sit
    # near the HBM roofline; use a smaller target on 64 MiB-VMEM parts.
    target_tile_bytes = (4 if small_vmem else 8) * 1024 * 1024
    if tile_rows is None:
        tile_rows = target_tile_bytes // (d * itemsize)
    max_rows = tile_budget // per_row_bytes
    tile_rows = min(tile_rows, max_rows)
    # Never allocate a tile taller than the (sublane-rounded) problem.
    tile_rows = min(tile_rows, _round_up(n, sub))
    tile_rows = max(sub, (tile_rows // sub) * sub)

    steps = pl.cdiv(n, tile_rows)
    # On 2-TensorCore parts keep the parallel grid even (and >= 2) so both
    # cores stay fed; shrinking tile_rows never violates the VMEM budget.
    if traits["two_core"] and n >= 2 * sub:
        want = max(steps, 2)
        if want % 2 == 1:
            want += 1
        tile_rows = max(sub, _round_up(pl.cdiv(n, want), sub))
        steps = pl.cdiv(n, tile_rows)

    needed = (4 * tile_rows * d * itemsize          # dbl-buffered in/out tiles
              + 3 * tile_rows * d * 4               # f32 intermediates
              + 4 * d * 8)                          # dbl-buffered (2, D) wb
    vmem_limit = int(min(hard_cap,
                         max(32 * 1024 * 1024, needed + 4 * 1024 * 1024)))

    return pl.pallas_call(
        _layernorm_kernel,
        out_shape=jax.ShapeDtypeStruct((n, d), dtype),
        grid_spec=pltpu.PrefetchScalarGridSpec(
            num_scalar_prefetch=0,
            grid=(steps,),
            in_specs=[
                pl.BlockSpec((tile_rows, d), lambda i: (i, 0)),
                pl.BlockSpec((2, d), lambda i: (0, 0)),
            ],
            out_specs=pl.BlockSpec((tile_rows, d), lambda i: (i, 0)),
        ),
        compiler_params=pltpu.CompilerParams(
            dimension_semantics=("parallel",),
            vmem_limit_bytes=vmem_limit,
        ),
    )(x2d, wb)


# ----------------------------------------------------------------------------
# Module
# ----------------------------------------------------------------------------
class NormLayer:
    """JAX/Pallas port of metra_skill_policy.NormLayer (forward only)."""

    def __init__(self, name, dim=None):
        if name == "none":
            self._dim = None
            self.weight = None
            self.bias = None
            self._wb_f32 = None
            self._wb_bf16 = None
        elif name == "layer":
            assert dim is not None
            self._dim = dim
            # nn.LayerNorm default (deterministic) init: weight=1, bias=0
            self.weight = jnp.ones((dim,), dtype=jnp.float32)
            self.bias = jnp.zeros((dim,), dtype=jnp.float32)
            # Fused (2, D) weight/bias blocks, built once (hoisted out of the
            # per-call wrapper).
            self._wb_f32 = jnp.stack([self.weight, self.bias]).astype(jnp.float32)
            self._wb_bf16 = self._wb_f32.astype(jnp.bfloat16)
        else:
            raise NotImplementedError(name)

    def __call__(self, features):
        if self._dim is None:
            return features
        d = features.shape[-1]
        assert d == self._dim
        lead = features.shape[:-1]
        x2d = features.reshape(-1, d)
        # bf16 epilogue only on chips with a bf16 VALU (v6e/v7x) and bf16 input;
        # statistics always stay in f32 inside the kernel.
        use_bf16_epi = (x2d.dtype == jnp.bfloat16) and _chip_traits()["bf16_valu"]
        wb = self._wb_bf16 if use_bf16_epi else self._wb_f32
        out = layernorm_pallas(x2d, wb)
        return out.reshape(*lead, d)


# ----------------------------------------------------------------------------
# Self-test
# ----------------------------------------------------------------------------
def _reference_layernorm(x, weight, bias):
    xf = x.astype(jnp.float32)
    mean = jnp.mean(xf, axis=-1, keepdims=True)
    var = jnp.mean((xf - mean) ** 2, axis=-1, keepdims=True)
    y = (xf - mean) / jnp.sqrt(var + EPS) * weight + bias
    return y.astype(x.dtype)


if __name__ == "__main__":
    key = jax.random.PRNGKey(0)
    k0, k1, k2, k3 = jax.random.split(key, 4)

    # --- Pallas hot path: lane-dense hidden dim -------------------------
    batch, seq, hidden = 2, 8, 128
    x = jax.random.normal(k0, (batch, seq, hidden), dtype=jnp.float32)
    layer = NormLayer("layer", dim=hidden)
    out = jax.block_until_ready(layer(x))
    ref = _reference_layernorm(x, layer.weight, layer.bias)
    assert jnp.allclose(out, ref, atol=1e-4, rtol=1e-4), "mismatch (D=128)"

    # --- Ragged row count (no pad/slice: partial tail block in-kernel) --
    x_ragged = jax.random.normal(k1, (3, 5, hidden), dtype=jnp.float32)
    out_r = jax.block_until_ready(layer(x_ragged))
    ref_r = _reference_layernorm(x_ragged, layer.weight, layer.bias)
    assert jnp.allclose(out_r, ref_r, atol=1e-4, rtol=1e-4), "mismatch (ragged)"

    # --- Force a multi-step grid with a non-divisible tail --------------
    x_tail = jax.random.normal(k3, (15, hidden), dtype=jnp.float32)
    out_t = jax.block_until_ready(
        layernorm_pallas(x_tail, layer._wb_f32, tile_rows=8))
    ref_t = _reference_layernorm(x_tail, layer.weight, layer.bias)
    assert jnp.allclose(out_t, ref_t, atol=1e-4, rtol=1e-4), "mismatch (tail)"

    # --- Small hidden dim: lane-sparse -> XLA fallback ------------------
    small = 32
    x_small = jax.random.normal(k2, (batch, seq, small), dtype=jnp.float32)
    layer_small = NormLayer("layer", dim=small)
    out_s = jax.block_until_ready(layer_small(x_small))
    ref_s = _reference_layernorm(x_small, layer_small.weight, layer_small.bias)
    assert jnp.allclose(out_s, ref_s, atol=1e-4, rtol=1e-4), "mismatch (D=32)"

    # --- 'none' branch is identity --------------------------------------
    ident = NormLayer("none")
    assert jnp.array_equal(ident(x), x)

    print("KERNEL_OK")
</pallas_src>

<mosaic_0001>
module attributes {stable_mosaic.version = 11 : i64} {
  func.func @_layernorm_kernel(%arg0: i32, %arg1: memref<16x128xf32, #tpu.memory_space<vmem>>, %arg2: memref<2x128xf32, #tpu.memory_space<vmem>>, %arg3: memref<16x128xf32, #tpu.memory_space<vmem>>) attributes {dimension_semantics = [#tpu.dimension_semantics<parallel>], iteration_bounds = array<i64: 1>, scalar_prefetch = 0 : i64, scratch_operands = 0 : i64, tpu.core_type = #tpu.core_type<tc>, window_params = [{transform_indices = @transform_0, window_bounds = array<i64: 16, 128>}, {pipeline_mode = #tpu.pipeline_mode<synchronous>, transform_indices = @transform_1, window_bounds = array<i64: 2, 128>}, {transform_indices = @transform_2, window_bounds = array<i64: 16, 128>}]} {
    %c0 = arith.constant 0 : index
    %c0_0 = arith.constant 0 : index
    %0 = vector.load %arg1[%c0, %c0_0] : memref<16x128xf32, #tpu.memory_space<vmem>>, vector<16x128xf32>
    %cst = arith.constant dense<0.000000e+00> : vector<16xf32>
    %1 = vector.multi_reduction <add>, %0, %cst [1] : vector<16x128xf32> to vector<16xf32>
    %2 = vector.shape_cast %1 : vector<16xf32> to vector<16x1xf32>
    %cst_1 = arith.constant 1.280000e+02 : f32
    %3 = vector.broadcast %cst_1 : f32 to vector<16x1xf32>
    %4 = arith.divf %2, %3 : vector<16x1xf32>
    %5 = vector.broadcast %4 : vector<16x1xf32> to vector<16x128xf32>
    %6 = arith.subf %0, %5 : vector<16x128xf32>
    %7 = arith.mulf %6, %6 : vector<16x128xf32>
    %cst_2 = arith.constant dense<0.000000e+00> : vector<16xf32>
    %8 = vector.multi_reduction <add>, %7, %cst_2 [1] : vector<16x128xf32> to vector<16xf32>
    %9 = vector.shape_cast %8 : vector<16xf32> to vector<16x1xf32>
    %cst_3 = arith.constant 1.280000e+02 : f32
    %10 = vector.broadcast %cst_3 : f32 to vector<16x1xf32>
    %11 = arith.divf %9, %10 : vector<16x1xf32>
    %cst_4 = arith.constant 9.99999974E-6 : f32
    %12 = vector.broadcast %cst_4 : f32 to vector<16x1xf32>
    %13 = arith.addf %11, %12 : vector<16x1xf32>
    %14 = math.rsqrt %13 : vector<16x1xf32>
    %15 = vector.broadcast %14 : vector<16x1xf32> to vector<16x128xf32>
    %16 = arith.mulf %6, %15 : vector<16x128xf32>
    %c0_5 = arith.constant 0 : index
    %c0_6 = arith.constant 0 : index
    %17 = vector.load %arg2[%c0_5, %c0_6] : memref<2x128xf32, #tpu.memory_space<vmem>>, vector<1x128xf32>
    %18 = vector.shape_cast %17 : vector<1x128xf32> to vector<128xf32>
    %c1 = arith.constant 1 : index
    %c0_7 = arith.constant 0 : index
    %19 = vector.load %arg2[%c1, %c0_7] : memref<2x128xf32, #tpu.memory_space<vmem>>, vector<1x128xf32>
    %20 = vector.shape_cast %19 : vector<1x128xf32> to vector<128xf32>
    %21 = vector.shape_cast %18 : vector<128xf32> to vector<1x128xf32>
    %22 = vector.broadcast %21 : vector<1x128xf32> to vector<16x128xf32>
    %23 = arith.mulf %16, %22 : vector<16x128xf32>
    %24 = vector.shape_cast %20 : vector<128xf32> to vector<1x128xf32>
    %25 = vector.broadcast %24 : vector<1x128xf32> to vector<16x128xf32>
    %26 = arith.addf %23, %25 : vector<16x128xf32>
    %c0_8 = arith.constant 0 : index
    %c0_9 = arith.constant 0 : index
    %27 = vector.load %arg3[%c0_8, %c0_9] : memref<16x128xf32, #tpu.memory_space<vmem>>, vector<16x128xf32>
    tpu.vector_store %arg3[%c0_8, %c0_9], %26 {strides = array<i32>} : memref<16x128xf32, #tpu.memory_space<vmem>>, vector<16x128xf32>,
    return
  }
  func.func @transform_0(%arg0: i32) -> (i32, i32) {
    %c0_i32 = arith.constant 0 : i32
    %c0_i32_0 = arith.constant 0 : i32
    return %arg0, %c0_i32 : i32, i32
  }
  func.func @transform_1(%arg0: i32) -> (i32, i32) {
    %c0_i32 = arith.constant 0 : i32
    %c0_i32_0 = arith.constant 0 : i32
    %c0_i32_1 = arith.constant 0 : i32
    return %c0_i32, %c0_i32_0 : i32, i32
  }
  func.func @transform_2(%arg0: i32) -> (i32, i32) {
    %c0_i32 = arith.constant 0 : i32
    %c0_i32_0 = arith.constant 0 : i32
    return %arg0, %c0_i32 : i32, i32
  }
}

</mosaic_0001>

<llo_original>
// kernel: tpu_custom_call.1
$region0: #{tpu_custom_call.1}
  #allocation0 [shape = 'u32[]', space=smem, size = 0x4, offset = 0x4, fixed_abs, tag = 'smem constant byte address 0x4 - core index']
  #allocation1 [shape = 'u32[72,128]{1,0:T(1,128)}', space=vmem, size = 0x9000, scoped, tag = 'internal scratch']
  %s0 = inlined_call_operand.hbm [shape: f32[16,128], index: 0, kind: input, shape index: {}]
  %s1 = inlined_call_operand.hbm [shape: f32[2,128], index: 1, kind: input, shape index: {}]
  %s2 = inlined_call_operand.hbm [shape: f32[16,128], index: 2, kind: output, shape index: {}]
  %s3 = sld [smem:[#allocation0]]
  $region26: #{tpu_custom_call.1} parent=0
    _
  %s5 = ssub.s32 1, %s3
  %s6 = scalar_select 0, %s5, %s3
  $region1: #{tpu_custom_call.1} parent=0
    #allocation2 [shape = 'u8[8192]{0}', space=vmem, size = 0x2000, scoped, tag = 'input window, operand 0, single buffered']
    #allocation3 [shape = 's32[1]{0}', space=sflag, size = 0x4, scoped, tag = 'scoped memory for tpu_custom_call.1']
    #allocation4 [shape = 's32[1]{0}', space=sflag, size = 0x4, scoped, tag = 'scoped memory for tpu_custom_call.1']
    #allocation5 [shape = 'u8[1024]{0}', space=vmem, size = 0x400, scoped, tag = 'input window, operand 1, single buffered']
    #allocation6 [shape = 's32[1]{0}', space=sflag, size = 0x4, scoped, tag = 'scoped memory for tpu_custom_call.1']
    #allocation7 [shape = 'u8[8192]{0}', space=vmem, size = 0x2000, scoped, tag = 'output window, operand 0, single buffered']
    %7 = vsyncpa [#allocation3], 0
    %8 = vsyncpa [#allocation6], 0
    %9 = vsyncpa [#allocation4], 0
    // Predicated region
    $region2: #{tpu_custom_call.1} parent=1 // pred_check
      _
    $region3: #{tpu_custom_call.1} parent=1 // pred_check_branch
      %11 = sbr.rel (0) target = $region5
    $region4: #{tpu_custom_call.1} parent=1 // pred_region
      %13 = vsyncadd [#allocation3], 0
      %s14 = sshll.u32 %s0, 4
      %s15 = int_to_ptr.hbm [resolvable:$true] %s14
      %s16 = sshll.u32 [#allocation2], 4
      %s17 = int_to_ptr.vmem [resolvable:$true] %s16
      %22 = dma.hbm_to_vmem [thread:$0]  %s15, 256, %s17, [#allocation3], 128, 128, 8
    $region5: #{tpu_custom_call.1} parent=1 // pred_fallthru
      _
    // Predicated region
    $region6: #{tpu_custom_call.1} parent=1 // pred_check
      _
    $region7: #{tpu_custom_call.1} parent=1 // pred_check_branch
      %24 = sbr.rel (0) target = $region9
    $region8: #{tpu_custom_call.1} parent=1 // pred_region
      %26 = vsyncadd [#allocation6], 0
      %s28 = sshll.u32 %s1, 4
      %s29 = int_to_ptr.hbm [resolvable:$true] %s28
      %s30 = sshll.u32 [#allocation5], 4
      %s31 = int_to_ptr.vmem [resolvable:$true] %s30
      %33 = dma.hbm_to_vmem [thread:$0]  %s29, 32, %s31, [#allocation6]
    $region9: #{tpu_custom_call.1} parent=1 // pred_fallthru
      _
    // Predicated region
    $region10: #{tpu_custom_call.1} parent=1 // pred_check
      _
    $region11: #{tpu_custom_call.1} parent=1 // pred_check_branch
      %35 = sbr.rel (0) target = $region13
    $region12: #{tpu_custom_call.1} parent=1 // pred_region
      %37 = dma.done [#allocation3], 256
    $region13: #{tpu_custom_call.1} parent=1 // pred_fallthru
      _
    // Predicated region
    $region14: #{tpu_custom_call.1} parent=1 // pred_check
      _
    $region15: #{tpu_custom_call.1} parent=1 // pred_check_branch
      %39 = sbr.rel (0) target = $region17
    $region16: #{tpu_custom_call.1} parent=1 // pred_region
      %41 = dma.done [#allocation6], 32
    $region17: #{tpu_custom_call.1} parent=1 // pred_fallthru
      _
    %v42 = vld [vmem:[#allocation2] sm:$0xff]
    %v43 = vld [vmem:[#allocation2 + $0x8] sm:$0xff]
    %44 = vadd.xlane.f32.xlu0 %v42
    %v45 = vpop.xlane.xlu0 %44
    %46 = vadd.xlane.f32.xlu0 %v43
    %v47 = vpop.xlane.xlu0 %46
    %v48 = vrcp.pop 128.0
    %v49 = vmul.f32 128.0, %v48
    %v50 = vsub.f32 1.0, %v49
    %v51 = vmul.f32 %v48, %v50
    %v52 = vadd.f32 %v48, %v51
    %vm53 = vweird.f32 %v48
    %v54 = vsel %vm53, %v48, %v52
    %v55 = vmul.f32 %v45, %v54
    %v56 = vmul.f32 %v47, %v54
    %v57 = vsub.f32 %v42, %v55
    %v58 = vsub.f32 %v43, %v56
    %v59 = vmul.f32 %v57, %v57
    %v60 = vmul.f32 %v58, %v58
    %61 = vadd.xlane.f32.xlu0 %v59
    %v62 = vpop.xlane.xlu0 %61
    %63 = vadd.xlane.f32.xlu0 %v60
    %v64 = vpop.xlane.xlu0 %63
    %v65 = vmul.f32 %v62, %v54
    %v66 = vmul.f32 %v64, %v54
    %v67 = vadd.f32 %v65, 1e-05
    %v68 = vadd.f32 %v66, 1e-05
    %v69 = vrsqrt.pop %v67
    %v70 = vmul.f32 %v69, %v67
    %v71 = vmul.f32 %v70, %v69
    %v72 = vmul.f32 0.5, %v71
    %v73 = vsub.f32 1.5, %v72
    %v74 = vmul.f32 %v69, %v73
    %vm75 = vweird.f32 %v67
    %vm76 = vweird.f32 %v69
    %vm77 = vmor %vm75, %vm76
    %v78 = vsel %vm77, %v69, %v74
    %v79 = vrsqrt.pop %v68
    %v80 = vmul.f32 %v79, %v68
    %v81 = vmul.f32 %v80, %v79
    %v82 = vmul.f32 0.5, %v81
    %v83 = vsub.f32 1.5, %v82
    %v84 = vmul.f32 %v79, %v83
    %vm85 = vweird.f32 %v68
    %vm86 = vweird.f32 %v79
    %vm87 = vmor %vm85, %vm86
    %v88 = vsel %vm87, %v79, %v84
    %v89 = vmul.f32 %v57, %v78
    %v90 = vmul.f32 %v58, %v88
    %v91 = vld [vmem:[#allocation5] sm:$0x1]
    %v92 = vld [vmem:[#allocation5 + $0x1] sm:$0x1]
    %v93 = vperm.slane %v91, 0
    %v94 = vmul.f32 %v89, %v93
    %v95 = vmul.f32 %v90, %v93
    %v96 = vperm.slane %v92, 0
    %v97 = vadd.f32 %v94, %v96
    %v98 = vadd.f32 %v95, %v96
    %99 = vst [vmem:[#allocation7] sm:$0xff] %v97
    %100 = vst [vmem:[#allocation7 + $0x8] sm:$0xff] %v98
    // Predicated region
    $region18: #{tpu_custom_call.1} parent=1 // pred_check
      _
    $region19: #{tpu_custom_call.1} parent=1 // pred_check_branch
      %102 = sbr.rel (0) target = $region21
    $region20: #{tpu_custom_call.1} parent=1 // pred_region
      %104 = vsyncadd [#allocation4], 0
      %s105 = sshll.u32 [#allocation7], 4
      %s106 = int_to_ptr.vmem [resolvable:$true] %s105
      %s107 = sshll.u32 %s2, 4
      %s108 = int_to_ptr.hbm [resolvable:$true] %s107
      %113 = dma.vmem_to_hbm [thread:$0]  %s106, 256, %s108, [#allocation4], 128, 128, 8
    $region21: #{tpu_custom_call.1} parent=1 // pred_fallthru
      _
    // Predicated region
    $region22: #{tpu_custom_call.1} parent=1 // pred_check
      _
    $region23: #{tpu_custom_call.1} parent=1 // pred_check_branch
      %115 = sbr.rel (0) target = $region25
    $region24: #{tpu_custom_call.1} parent=1 // pred_region
      %117 = dma.done [#allocation4], 256
    $region25: #{tpu_custom_call.1} parent=1 // pred_fallthru
      _
    %118 = vsyncpa [#allocation3], 1
    %119 = vsyncpa [#allocation6], 1
    %120 = vsyncpa [#allocation4], 1

</llo_original>
